<compile_context>
chip_gen: v6e
topology: v6e:2x2x1
jax: 0.10.0
libtpu: 0.0.40
codegen_flags: <defaults>
</compile_context>

<pallas_src>
import jax
import jax.numpy as jnp
from jax import lax
from jax.experimental import pallas as pl
from jax.experimental.pallas import tpu as pltpu


LANES = 128   # lane width of every tile
X_ROWS = 8    # batch rows padded to one sublane group
W_ROWS = 24   # 20 features + 1 bias-forward row, padded to a sublane multiple
FEAT = 20     # real feature count of the module


def fixed_hidden_mlp_kernel(x_ref, w_ref, out_ref):
    # xs:  (8,128)   [0:batch, 0:20] = X, [0:batch, 20] = 1 (bias column), rest 0
    # m1t: (24,128)  rows = out-features (+ row 20 forwards the ones column),
    #                lanes = augmented in-features; encodes (W.T@R) and (b@R + 1)
    # w2:  (24,128)  rows = augmented in-features (row 20 = b), lanes = out-features
    xs = x_ref[...]
    m1t = w_ref[0:W_ROWS, :]
    w2 = w_ref[W_ROWS:2 * W_ROWS, :]

    # h = relu((X@W.T + b) @ R + 1) == relu(X_aug . M1_aug); contraction on the
    # lane axis of both operands (A @ B^T pattern) -> (8, 24).  The forwarded
    # ones column lands in lane FEAT and survives the relu (relu(1) == 1).
    h = lax.dot_general(xs, m1t, (((1,), (1,)), ((), ())),
                        preferred_element_type=jnp.float32,
                        precision=lax.Precision.HIGHEST)
    h = jnp.maximum(h, 0.0)

    # h = h @ W.T + b ; the bias comes from the forwarded ones column hitting
    # row FEAT of w2.  Standard contraction -> (8, 128).
    h = lax.dot_general(h, w2, (((1,), (0,)), ((), ())),
                        preferred_element_type=jnp.float32,
                        precision=lax.Precision.HIGHEST)

    # Padded rows/lanes of h are exactly zero (zero inputs, zero weight padding),
    # so full-tile reductions equal reductions over the real (batch, 20) block.
    # Reduce lanes first, then sublanes.
    s = jnp.sum(jnp.sum(jnp.abs(h), axis=1, keepdims=True))   # sum(|h|)
    hs = jnp.sum(jnp.sum(h, axis=1, keepdims=True))           # sum(h)

    # while sum(|h|) > 1: h /= 2   ==>   hs *= 2**-n,  n = ceil(log2 s) (0 if s<=1).
    # n is taken from the f32 exponent bits (s >= 0 so the sign bit is clear);
    # multiplying by an exact power of two reproduces the loop bit-for-bit for
    # normal-range results.
    bits = lax.bitcast_convert_type(s, jnp.int32)
    unbiased = lax.shift_right_logical(bits, jnp.int32(23)) - 127
    frac_nz = jnp.bitwise_and(bits, jnp.int32(0x007FFFFF)) != 0
    n = jnp.where(s > 1.0, unbiased + frac_nz.astype(jnp.int32), 0)
    n = jnp.minimum(n, 126)           # keep 2**-n a normal float (never hit here)
    scale = lax.bitcast_convert_type((jnp.int32(127) - n) * jnp.int32(1 << 23),
                                     jnp.float32)
    out_ref[0, 0] = hs * scale


def pack_fixed_hidden_mlp_params(w_lin, b_lin, w_rand):
    """Build the constant (48, 128) weight slab ONCE (outside the hot path)."""
    w_lin = w_lin.astype(jnp.float32)
    b_lin = b_lin.astype(jnp.float32)
    w_rand = w_rand.astype(jnp.float32)
    hi = lax.Precision.HIGHEST

    # Fold the first two matmuls: linear(X) @ R = X @ (W.T@R) + (b@R); "+1" folded too.
    m1 = jnp.dot(w_lin.T, w_rand, precision=hi)          # (20, 20)
    c1 = jnp.dot(b_lin, w_rand, precision=hi) + 1.0      # (20,)

    # First-matmul tile (contraction on lanes):  m1t[j, i] = M1_aug[i, j].
    # Lane FEAT carries the folded bias c1; row FEAT forwards X's ones column.
    m1t = jnp.zeros((W_ROWS, LANES), jnp.float32)
    m1t = m1t.at[0:FEAT, 0:FEAT].set(m1.T)
    m1t = m1t.at[0:FEAT, FEAT].set(c1)
    m1t = m1t.at[FEAT, FEAT].set(1.0)

    # Second-matmul tile (standard contraction): rows = [W.T ; b].
    w2 = jnp.zeros((W_ROWS, LANES), jnp.float32)
    w2 = w2.at[0:FEAT, 0:FEAT].set(w_lin.T)
    w2 = w2.at[FEAT, 0:FEAT].set(b_lin)

    return jnp.concatenate([m1t, w2], axis=0)             # (48, 128), ~24 KiB


def fixed_hidden_mlp(x, packed_weights):
    """Per-call path: pad X into one (8,128) tile and run the kernel."""
    batch, feat = x.shape
    assert feat == FEAT and batch <= X_ROWS

    xs = jnp.zeros((X_ROWS, LANES), jnp.float32)
    xs = xs.at[0:batch, 0:feat].set(x.astype(jnp.float32))
    xs = xs.at[0:batch, feat].set(1.0)                     # bias-augmentation col

    out = pl.pallas_call(
        fixed_hidden_mlp_kernel,
        out_shape=jax.ShapeDtypeStruct((1, 1), jnp.float32),
        in_specs=[pl.BlockSpec(memory_space=pltpu.MemorySpace.VMEM),
                  pl.BlockSpec(memory_space=pltpu.MemorySpace.VMEM)],
        out_specs=pl.BlockSpec(memory_space=pltpu.MemorySpace.SMEM),
        cost_estimate=pl.CostEstimate(
            flops=2 * X_ROWS * LANES * W_ROWS + 2 * X_ROWS * W_ROWS * LANES,
            bytes_accessed=(X_ROWS * LANES + 2 * W_ROWS * LANES) * 4 + 4,
            transcendentals=0),
    )(xs, packed_weights)
    return out[0, 0]


def fixed_hidden_mlp_ref(x, w_lin, b_lin, w_rand):
    # Unfused reference matching the original PyTorch forward exactly.
    hi = lax.Precision.HIGHEST
    h = jnp.dot(x, w_lin.T, precision=hi) + b_lin
    h = jnp.maximum(jnp.dot(h, w_rand, precision=hi) + 1.0, 0.0)
    h = jnp.dot(h, w_lin.T, precision=hi) + b_lin
    h = lax.while_loop(lambda c: jnp.sum(jnp.abs(c)) > 1.0, lambda c: c / 2.0, h)
    return jnp.sum(h)


if __name__ == "__main__":
    key = jax.random.PRNGKey(0)
    k_x, k_w, k_b, k_r = jax.random.split(key, 4)

    in_features = out_features = 20
    batch = 2

    # X = torch.rand(2, 20)  -> uniform [0, 1)
    x = jax.random.uniform(k_x, (batch, in_features), dtype=jnp.float32)

    # nn.Linear(20, 20): weight (out, in), bias (out,), uniform(-1/sqrt(in), 1/sqrt(in))
    bound = 1.0 / jnp.sqrt(jnp.float32(in_features))
    w_lin = jax.random.uniform(k_w, (out_features, in_features),
                               minval=-bound, maxval=bound, dtype=jnp.float32)
    b_lin = jax.random.uniform(k_b, (out_features,),
                               minval=-bound, maxval=bound, dtype=jnp.float32)

    # rand_weight = torch.rand((20, 20)) -> uniform [0, 1), non-trainable
    w_rand = jax.random.uniform(k_r, (20, 20), dtype=jnp.float32)

    # Pack the constant weights once; only X flows through the per-call path.
    packed = jax.block_until_ready(
        pack_fixed_hidden_mlp_params(w_lin, b_lin, w_rand))

    run = jax.jit(fixed_hidden_mlp)
    result = jax.block_until_ready(run(x, packed))

    ref = fixed_hidden_mlp_ref(x, w_lin, b_lin, w_rand)
    assert jnp.allclose(result, ref, rtol=1e-4, atol=1e-5), (result, ref)

    print("KERNEL_OK")
</pallas_src>

<mosaic_0001>
module attributes {stable_mosaic.version = 11 : i64} {
  func.func @fixed_hidden_mlp_kernel(%arg0: memref<8x128xf32, #tpu.memory_space<vmem>>, %arg1: memref<48x128xf32, #tpu.memory_space<vmem>>, %arg2: memref<1x1xf32, #tpu.memory_space<smem>>) attributes {dimension_semantics = [], scalar_prefetch = 0 : i64, scratch_operands = 0 : i64, tpu.core_type = #tpu.core_type<tc>} {
    %c0 = arith.constant 0 : index
    %c0_0 = arith.constant 0 : index
    %0 = vector.load %arg0[%c0, %c0_0] : memref<8x128xf32, #tpu.memory_space<vmem>>, vector<8x128xf32>
    %c0_1 = arith.constant 0 : index
    %c0_2 = arith.constant 0 : index
    %1 = vector.load %arg1[%c0_1, %c0_2] : memref<48x128xf32, #tpu.memory_space<vmem>>, vector<24x128xf32>
    %c24 = arith.constant 24 : index
    %c0_3 = arith.constant 0 : index
    %2 = vector.load %arg1[%c24, %c0_3] : memref<48x128xf32, #tpu.memory_space<vmem>>, vector<24x128xf32>
    %cst = arith.constant dense<0.000000e+00> : vector<8x24xf32>
    %3 = tpu.matmul %0, %1, %cst {dimension_numbers = #tpu.dot_dimension_numbers<[1], [1], [0], [0], [0, 0, 1, 0], [], []>, precision = #tpu.contract_precision<fp32>} : vector<8x128xf32>, vector<24x128xf32>, vector<8x24xf32> -> vector<8x24xf32>
    %cst_4 = arith.constant 0.000000e+00 : f32
    %4 = vector.broadcast %cst_4 : f32 to vector<8x24xf32>
    %5 = arith.maximumf %3, %4 : vector<8x24xf32>
    %cst_5 = arith.constant dense<0.000000e+00> : vector<8x128xf32>
    %6 = tpu.matmul %5, %2, %cst_5 {dimension_numbers = #tpu.dot_dimension_numbers<[1], [0], [0], [1], [0, 0, 1, 1], [], []>, precision = #tpu.contract_precision<fp32>} : vector<8x24xf32>, vector<24x128xf32>, vector<8x128xf32> -> vector<8x128xf32>
    %7 = math.absf %6 : vector<8x128xf32>
    %cst_6 = arith.constant dense<0.000000e+00> : vector<8xf32>
    %8 = vector.multi_reduction <add>, %7, %cst_6 [1] : vector<8x128xf32> to vector<8xf32>
    %9 = vector.shape_cast %8 : vector<8xf32> to vector<8x1xf32>
    %10 = vector.shape_cast %9 : vector<8x1xf32> to vector<1x8x1xf32>
    %cst_7 = arith.constant dense<0.000000e+00> : vector<1xf32>
    %11 = vector.multi_reduction <add>, %10, %cst_7 [1, 2] : vector<1x8x1xf32> to vector<1xf32>
    %12 = vector.shape_cast %11 : vector<1xf32> to vector<1x1x1xf32>
    %13 = vector.extract %12[0, 0, 0] : f32 from vector<1x1x1xf32>
    %cst_8 = arith.constant dense<0.000000e+00> : vector<8xf32>
    %14 = vector.multi_reduction <add>, %6, %cst_8 [1] : vector<8x128xf32> to vector<8xf32>
    %15 = vector.shape_cast %14 : vector<8xf32> to vector<8x1xf32>
    %16 = vector.shape_cast %15 : vector<8x1xf32> to vector<1x8x1xf32>
    %cst_9 = arith.constant dense<0.000000e+00> : vector<1xf32>
    %17 = vector.multi_reduction <add>, %16, %cst_9 [1, 2] : vector<1x8x1xf32> to vector<1xf32>
    %18 = vector.shape_cast %17 : vector<1xf32> to vector<1x1x1xf32>
    %19 = vector.extract %18[0, 0, 0] : f32 from vector<1x1x1xf32>
    %20 = arith.bitcast %13 : f32 to i32
    %c23_i32 = arith.constant 23 : i32
    %21 = arith.shrui %20, %c23_i32 : i32
    %c127_i32 = arith.constant 127 : i32
    %22 = arith.subi %21, %c127_i32 : i32
    %c8388607_i32 = arith.constant 8388607 : i32
    %23 = arith.andi %20, %c8388607_i32 : i32
    %c0_i32 = arith.constant 0 : i32
    %24 = arith.cmpi ne, %23, %c0_i32 : i32
    %cst_10 = arith.constant 1.000000e+00 : f32
    %25 = arith.cmpf ogt, %13, %cst_10 : f32
    %26 = arith.extui %24 : i1 to i32
    %27 = arith.addi %22, %26 : i32
    %c0_i32_11 = arith.constant 0 : i32
    %28 = arith.select %25, %27, %c0_i32_11 : i32
    %c126_i32 = arith.constant 126 : i32
    %29 = arith.minsi %28, %c126_i32 : i32
    %c127_i32_12 = arith.constant 127 : i32
    %30 = arith.subi %c127_i32_12, %29 : i32
    %c8388608_i32 = arith.constant 8388608 : i32
    %31 = arith.muli %30, %c8388608_i32 : i32
    %32 = arith.bitcast %31 : i32 to f32
    %33 = arith.mulf %19, %32 : f32
    %c0_13 = arith.constant 0 : index
    %c0_14 = arith.constant 0 : index
    %34 = memref.load %arg2[%c0_13, %c0_14] : memref<1x1xf32, #tpu.memory_space<smem>>
    memref.store %33, %arg2[%c0_13, %c0_14] : memref<1x1xf32, #tpu.memory_space<smem>>
    return
  }
}

</mosaic_0001>

<llo_original>
// kernel: fixed_hidden_mlp.1
$region0: #{fixed_hidden_mlp.1}
  #allocation0 [shape = 'u32[]', space=smem, size = 0x4, offset = 0x4, fixed_abs, tag = 'smem constant byte address 0x4 - core index']
  #allocation1 [shape = 'u32[144,128]{1,0:T(1,128)}', space=vmem, size = 0x12000, scoped, tag = 'internal scratch']
  %s0 = inlined_call_operand.vmem [shape: f32[8,128], index: 0, kind: input, shape index: {}]
  %s1 = inlined_call_operand.hbm [shape: f32[48,128], index: 1, kind: input, shape index: {}]
  %s2 = inlined_call_operand.hbm [shape: f32[1,1], index: 2, kind: output, shape index: {}]
  %s3 = sld [smem:[#allocation0]]
  $region22: #{fixed_hidden_mlp.1} parent=0
    _
  %s5 = ssub.s32 1, %s3
  %s6 = scalar_select 0, %s5, %s3
  $region1: #{fixed_hidden_mlp.1} parent=0
    #allocation2 [shape = 'u8[24576]{0}', space=vmem, size = 0x6000, scoped, tag = 'input window, operand 1, single buffered']
    #allocation3 [shape = 's32[1]{0}', space=sflag, size = 0x4, scoped, tag = 'scoped memory for fixed_hidden_mlp.1']
    #allocation4 [shape = 's32[1]{0}', space=sflag, size = 0x4, scoped, tag = 'scoped memory for fixed_hidden_mlp.1']
    #allocation5 [shape = 'u8[512]{0}', space=smem, size = 0x200, scoped, tag = 'output window, operand 0, single buffered']
    %7 = vsyncpa [#allocation3], 0
    %8 = vsyncpa [#allocation4], 0
    // Predicated region
    $region2: #{fixed_hidden_mlp.1} parent=1 // pred_check
      _
    $region3: #{fixed_hidden_mlp.1} parent=1 // pred_check_branch
      %10 = sbr.rel (0) target = $region5
    $region4: #{fixed_hidden_mlp.1} parent=1 // pred_region
      _
    $region5: #{fixed_hidden_mlp.1} parent=1 // pred_fallthru
      _
    // Predicated region
    $region6: #{fixed_hidden_mlp.1} parent=1 // pred_check
      _
    $region7: #{fixed_hidden_mlp.1} parent=1 // pred_check_branch
      %12 = sbr.rel (0) target = $region9
    $region8: #{fixed_hidden_mlp.1} parent=1 // pred_region
      %s14 = ssub.s32 768, 768
      %15 = vsyncadd [#allocation3], %s14
      %s16 = sshll.u32 [#allocation2], 4
      %s17 = int_to_ptr.vmem [resolvable:$true] %s16
      %22 = dma.hbm_to_vmem [thread:$0]  %s1, 768, %s17, [#allocation3], 128, 128, 8
    $region9: #{fixed_hidden_mlp.1} parent=1 // pred_fallthru
      _
    // Predicated region
    $region10: #{fixed_hidden_mlp.1} parent=1 // pred_check
      _
    $region11: #{fixed_hidden_mlp.1} parent=1 // pred_check_branch
      %24 = sbr.rel (0) target = $region13
    $region12: #{fixed_hidden_mlp.1} parent=1 // pred_region
      %25 = dma.done [#allocation3], 768
    $region13: #{fixed_hidden_mlp.1} parent=1 // pred_fallthru
      _
    %v26 = vld [vmem:[%s0] sm:$0xff]
    %v27 = vld [vmem:[#allocation2] sm:$0xff]
    %v28 = vld [vmem:[#allocation2 + $0x8] sm:$0xff]
    %v29 = vld [vmem:[#allocation2 + $0x10] sm:$0xff]
    %v30 = vld [vmem:[#allocation2 + $0x18] sm:$0xff]
    %v31 = vld [vmem:[#allocation2 + $0x20] sm:$0xff]
    %v32 = vld [vmem:[#allocation2 + $0x28] sm:$0xff]
    %33 = vmatprep.subr.mxu0 0.0
    %34 = vmatpush1.xpose.msra.mxu0 0.0
    %35 = vmatprep.subr.mxu0 0.0
    %36 = vmatpush1.xpose.msra.mxu0 0.0
    %37 = vmatprep.subr.mxu0 0.0
    %38 = vmatpush1.xpose.msra.mxu0 0.0
    %39 = vmatprep.subr.mxu0 0.0
    %40 = vmatpush1.xpose.msra.mxu0 0.0
    %41 = vmatprep.subr.mxu0 0.0
    %42 = vmatpush1.xpose.msra.mxu0 0.0
    %43 = vmatprep.subr.mxu0 0.0
    %44 = vmatpush1.xpose.msra.mxu0 0.0
    %45 = vmatprep.subr.mxu0 0.0
    %46 = vmatpush1.xpose.msra.mxu0 0.0
    %47 = vmatprep.subr.mxu0 0.0
    %48 = vmatpush1.xpose.msra.mxu0 0.0
    %49 = vmatprep.subr.mxu0 0.0
    %50 = vmatpush1.xpose.msra.mxu0 0.0
    %51 = vmatprep.subr.mxu0 0.0
    %52 = vmatpush1.xpose.msra.mxu0 0.0
    %53 = vmatprep.subr.mxu0 0.0
    %54 = vmatpush1.xpose.msra.mxu0 0.0
    %55 = vmatprep.subr.mxu0 0.0
    %56 = vmatpush1.xpose.msra.mxu0 0.0
    %57 = vmatprep.subr.mxu0 0.0
    %58 = vmatpush1.xpose.msra.mxu0 0.0
    %59 = vmatprep.subr.mxu0 0.0
    %v60 = vand.u32 %v29, 4294901760
    %61 = vmatpush1.xpose.msra.mxu0 %v60
    %62 = vmatprep.subr.mxu0 0.0
    %v63 = vand.u32 %v28, 4294901760
    %64 = vmatpush1.xpose.msra.mxu0 %v63
    %65 = vmatprep.subr.mxu0 0.0
    %v66 = vand.u32 %v27, 4294901760
    %67 = vmatpush1.xpose.msra.mxu0 %v66
    %68 = vmatprep.subr.mxu0 0.0
    %69 = vmatpush2.xpose.msra.mxu0 0.0
    %70 = vmatprep.subr.mxu0 0.0
    %71 = vmatpush2.xpose.msra.mxu0 0.0
    %72 = vmatprep.subr.mxu0 0.0
    %73 = vmatpush2.xpose.msra.mxu0 0.0
    %74 = vmatprep.subr.mxu0 0.0
    %75 = vmatpush2.xpose.msra.mxu0 0.0
    %76 = vmatprep.subr.mxu0 0.0
    %77 = vmatpush2.xpose.msra.mxu0 0.0
    %78 = vmatprep.subr.mxu0 0.0
    %79 = vmatpush2.xpose.msra.mxu0 0.0
    %80 = vmatprep.subr.mxu0 0.0
    %81 = vmatpush2.xpose.msra.mxu0 0.0
    %82 = vmatprep.subr.mxu0 0.0
    %83 = vmatpush2.xpose.msra.mxu0 0.0
    %84 = vmatprep.subr.mxu0 0.0
    %85 = vmatpush2.xpose.msra.mxu0 0.0
    %86 = vmatprep.subr.mxu0 0.0
    %87 = vmatpush2.xpose.msra.mxu0 0.0
    %88 = vmatprep.subr.mxu0 0.0
    %89 = vmatpush2.xpose.msra.mxu0 0.0
    %90 = vmatprep.subr.mxu0 0.0
    %91 = vmatpush2.xpose.msra.mxu0 0.0
    %92 = vmatprep.subr.mxu0 0.0
    %93 = vmatpush2.xpose.msra.mxu0 0.0
    %94 = vmatprep.subr.mxu0 0.0
    %95 = vmatpush2.xpose.msra.mxu0 0.0
    %96 = vmatprep.subr.mxu0 0.0
    %97 = vmatpush2.xpose.msra.mxu0 0.0
    %98 = vmatprep.subr.mxu0 0.0
    %99 = vmatpush2.xpose.msra.mxu0 0.0
    %100 = vmatprep.mubr.f32.mxu0 0.0
    %v101 = vand.u32 %v26, 4294901760
    %v102 = vsub.f32 %v26, %v101
    %v103 = vand.u32 %v102, 4294901760
    %v104 = vsub.f32 %v102, %v103
    %v105 = vand.u32 %v104, 4294901760
    %106 = vmatmul.mubr.f32.gmra.mxu0 %v105
    %v107 = vpop.f32.mrf.mxu0
    %v108 = vadd.f32 0.0, %v107
    %v109 = vpop.f32.mrf.mxu0
    %110 = vdwg.mxu0
    %111 = vmatprep.subr.mxu0 0.0
    %112 = vmatpush1.xpose.msra.mxu0 0.0
    %113 = vmatprep.subr.mxu0 0.0
    %114 = vmatpush1.xpose.msra.mxu0 0.0
    %115 = vmatprep.subr.mxu0 0.0
    %116 = vmatpush1.xpose.msra.mxu0 0.0
    %117 = vmatprep.subr.mxu0 0.0
    %118 = vmatpush1.xpose.msra.mxu0 0.0
    %119 = vmatprep.subr.mxu0 0.0
    %120 = vmatpush1.xpose.msra.mxu0 0.0
    %121 = vmatprep.subr.mxu0 0.0
    %122 = vmatpush1.xpose.msra.mxu0 0.0
    %123 = vmatprep.subr.mxu0 0.0
    %124 = vmatpush1.xpose.msra.mxu0 0.0
    %125 = vmatprep.subr.mxu0 0.0
    %126 = vmatpush1.xpose.msra.mxu0 0.0
    %127 = vmatprep.subr.mxu0 0.0
    %128 = vmatpush1.xpose.msra.mxu0 0.0
    %129 = vmatprep.subr.mxu0 0.0
    %130 = vmatpush1.xpose.msra.mxu0 0.0
    %131 = vmatprep.subr.mxu0 0.0
    %132 = vmatpush1.xpose.msra.mxu0 0.0
    %133 = vmatprep.subr.mxu0 0.0
    %134 = vmatpush1.xpose.msra.mxu0 0.0
    %135 = vmatprep.subr.mxu0 0.0
    %136 = vmatpush1.xpose.msra.mxu0 0.0
    %137 = vmatprep.subr.mxu0 0.0
    %v138 = vand.u32 %v29, 4294901760
    %v139 = vsub.f32 %v29, %v138
    %v140 = vand.u32 %v139, 4294901760
    %v141 = vsub.f32 %v139, %v140
    %v142 = vand.u32 %v141, 4294901760
    %143 = vmatpush1.xpose.msra.mxu0 %v142
    %144 = vmatprep.subr.mxu0 0.0
    %v145 = vand.u32 %v28, 4294901760
    %v146 = vsub.f32 %v28, %v145
    %v147 = vand.u32 %v146, 4294901760
    %v148 = vsub.f32 %v146, %v147
    %v149 = vand.u32 %v148, 4294901760
    %150 = vmatpush1.xpose.msra.mxu0 %v149
    %151 = vmatprep.subr.mxu0 0.0
    %v152 = vand.u32 %v27, 4294901760
    %v153 = vsub.f32 %v27, %v152
    %v154 = vand.u32 %v153, 4294901760
    %v155 = vsub.f32 %v153, %v154
    %v156 = vand.u32 %v155, 4294901760
    %157 = vmatpush1.xpose.msra.mxu0 %v156
    %158 = vmatprep.subr.mxu0 0.0
    %159 = vmatpush2.xpose.msra.mxu0 0.0
    %160 = vmatprep.subr.mxu0 0.0
    %161 = vmatpush2.xpose.msra.mxu0 0.0
    %162 = vmatprep.subr.mxu0 0.0
    %163 = vmatpush2.xpose.msra.mxu0 0.0
    %164 = vmatprep.subr.mxu0 0.0
    %165 = vmatpush2.xpose.msra.mxu0 0.0
    %166 = vmatprep.subr.mxu0 0.0
    %167 = vmatpush2.xpose.msra.mxu0 0.0
    %168 = vmatprep.subr.mxu0 0.0
    %169 = vmatpush2.xpose.msra.mxu0 0.0
    %170 = vmatprep.subr.mxu0 0.0
    %171 = vmatpush2.xpose.msra.mxu0 0.0
    %172 = vmatprep.subr.mxu0 0.0
    %173 = vmatpush2.xpose.msra.mxu0 0.0
    %174 = vmatprep.subr.mxu0 0.0
    %175 = vmatpush2.xpose.msra.mxu0 0.0
    %176 = vmatprep.subr.mxu0 0.0
    %177 = vmatpush2.xpose.msra.mxu0 0.0
    %178 = vmatprep.subr.mxu0 0.0
    %179 = vmatpush2.xpose.msra.mxu0 0.0
    %180 = vmatprep.subr.mxu0 0.0
    %181 = vmatpush2.xpose.msra.mxu0 0.0
    %182 = vmatprep.subr.mxu0 0.0
    %183 = vmatpush2.xpose.msra.mxu0 0.0
    %184 = vmatprep.subr.mxu0 0.0
    %185 = vmatpush2.xpose.msra.mxu0 0.0
    %186 = vmatprep.subr.mxu0 0.0
    %187 = vmatpush2.xpose.msra.mxu0 0.0
    %188 = vmatprep.subr.mxu0 0.0
    %189 = vmatpush2.xpose.msra.mxu0 0.0
    %190 = vmatprep.mubr.f32.mxu0 0.0
    %v191 = vand.u32 %v26, 4294901760
    %192 = vmatmul.mubr.f32.gmra.mxu0 %v191
    %v193 = vpop.f32.mrf.mxu0
    %v194 = vadd.f32 %v108, %v193
    %v195 = vpop.f32.mrf.mxu0
    %196 = vdwg.mxu0
    %197 = vmatprep.subr.mxu0 0.0
    %198 = vmatpush1.xpose.msra.mxu0 0.0
    %199 = vmatprep.subr.mxu0 0.0
    %200 = vmatpush1.xpose.msra.mxu0 0.0
    %201 = vmatprep.subr.mxu0 0.0
    %202 = vmatpush1.xpose.msra.mxu0 0.0
    %203 = vmatprep.subr.mxu0 0.0
    %204 = vmatpush1.xpose.msra.mxu0 0.0
    %205 = vmatprep.subr.mxu0 0.0
    %206 = vmatpush1.xpose.msra.mxu0 0.0
    %207 = vmatprep.subr.mxu0 0.0
    %208 = vmatpush1.xpose.msra.mxu0 0.0
    %209 = vmatprep.subr.mxu0 0.0
    %210 = vmatpush1.xpose.msra.mxu0 0.0
    %211 = vmatprep.subr.mxu0 0.0
    %212 = vmatpush1.xpose.msra.mxu0 0.0
    %213 = vmatprep.subr.mxu0 0.0
    %214 = vmatpush1.xpose.msra.mxu0 0.0
    %215 = vmatprep.subr.mxu0 0.0
    %216 = vmatpush1.xpose.msra.mxu0 0.0
    %217 = vmatprep.subr.mxu0 0.0
    %218 = vmatpush1.xpose.msra.mxu0 0.0
    %219 = vmatprep.subr.mxu0 0.0
    %220 = vmatpush1.xpose.msra.mxu0 0.0
    %221 = vmatprep.subr.mxu0 0.0
    %222 = vmatpush1.xpose.msra.mxu0 0.0
    %223 = vmatprep.subr.mxu0 0.0
    %v224 = vand.u32 %v29, 4294901760
    %v225 = vsub.f32 %v29, %v224
    %226 = vmatpush1.xpose.msra.mxu0 %v225
    %227 = vmatprep.subr.mxu0 0.0
    %v228 = vand.u32 %v28, 4294901760
    %v229 = vsub.f32 %v28, %v228
    %230 = vmatpush1.xpose.msra.mxu0 %v229
    %231 = vmatprep.subr.mxu0 0.0
    %v232 = vand.u32 %v27, 4294901760
    %v233 = vsub.f32 %v27, %v232
    %234 = vmatpush1.xpose.msra.mxu0 %v233
    %235 = vmatprep.subr.mxu0 0.0
    %236 = vmatpush2.xpose.msra.mxu0 0.0
    %237 = vmatprep.subr.mxu0 0.0
    %238 = vmatpush2.xpose.msra.mxu0 0.0
    %239 = vmatprep.subr.mxu0 0.0
    %240 = vmatpush2.xpose.msra.mxu0 0.0
    %241 = vmatprep.subr.mxu0 0.0
    %242 = vmatpush2.xpose.msra.mxu0 0.0
    %243 = vmatprep.subr.mxu0 0.0
    %244 = vmatpush2.xpose.msra.mxu0 0.0
    %245 = vmatprep.subr.mxu0 0.0
    %246 = vmatpush2.xpose.msra.mxu0 0.0
    %247 = vmatprep.subr.mxu0 0.0
    %248 = vmatpush2.xpose.msra.mxu0 0.0
    %249 = vmatprep.subr.mxu0 0.0
    %250 = vmatpush2.xpose.msra.mxu0 0.0
    %251 = vmatprep.subr.mxu0 0.0
    %252 = vmatpush2.xpose.msra.mxu0 0.0
    %253 = vmatprep.subr.mxu0 0.0
    %254 = vmatpush2.xpose.msra.mxu0 0.0
    %255 = vmatprep.subr.mxu0 0.0
    %256 = vmatpush2.xpose.msra.mxu0 0.0
    %257 = vmatprep.subr.mxu0 0.0
    %258 = vmatpush2.xpose.msra.mxu0 0.0
    %259 = vmatprep.subr.mxu0 0.0
    %260 = vmatpush2.xpose.msra.mxu0 0.0
    %261 = vmatprep.subr.mxu0 0.0
    %262 = vmatpush2.xpose.msra.mxu0 0.0
    %263 = vmatprep.subr.mxu0 0.0
    %264 = vmatpush2.xpose.msra.mxu0 0.0
    %265 = vmatprep.subr.mxu0 0.0
    %266 = vmatpush2.xpose.msra.mxu0 0.0
    %267 = vmatprep.mubr.f32.mxu0 0.0
    %v268 = vand.u32 %v26, 4294901760
    %v269 = vsub.f32 %v26, %v268
    %270 = vmatmul.mubr.f32.gmra.mxu0 %v269
    %v271 = vpop.f32.mrf.mxu0
    %v272 = vadd.f32 %v194, %v271
    %v273 = vpop.f32.mrf.mxu0
    %274 = vdwg.mxu0
    %275 = vmatprep.subr.mxu0 0.0
    %276 = vmatpush1.xpose.msra.mxu0 0.0
    %277 = vmatprep.subr.mxu0 0.0
    %278 = vmatpush1.xpose.msra.mxu0 0.0
    %279 = vmatprep.subr.mxu0 0.0
    %280 = vmatpush1.xpose.msra.mxu0 0.0
    %281 = vmatprep.subr.mxu0 0.0
    %282 = vmatpush1.xpose.msra.mxu0 0.0
    %283 = vmatprep.subr.mxu0 0.0
    %284 = vmatpush1.xpose.msra.mxu0 0.0
    %285 = vmatprep.subr.mxu0 0.0
    %286 = vmatpush1.xpose.msra.mxu0 0.0
    %287 = vmatprep.subr.mxu0 0.0
    %288 = vmatpush1.xpose.msra.mxu0 0.0
    %289 = vmatprep.subr.mxu0 0.0
    %290 = vmatpush1.xpose.msra.mxu0 0.0
    %291 = vmatprep.subr.mxu0 0.0
    %292 = vmatpush1.xpose.msra.mxu0 0.0
    %293 = vmatprep.subr.mxu0 0.0
    %294 = vmatpush1.xpose.msra.mxu0 0.0
    %295 = vmatprep.subr.mxu0 0.0
    %296 = vmatpush1.xpose.msra.mxu0 0.0
    %297 = vmatprep.subr.mxu0 0.0
    %298 = vmatpush1.xpose.msra.mxu0 0.0
    %299 = vmatprep.subr.mxu0 0.0
    %300 = vmatpush1.xpose.msra.mxu0 0.0
    %301 = vmatprep.subr.mxu0 0.0
    %v302 = vand.u32 %v29, 4294901760
    %303 = vmatpush1.xpose.msra.mxu0 %v302
    %304 = vmatprep.subr.mxu0 0.0
    %v305 = vand.u32 %v28, 4294901760
    %306 = vmatpush1.xpose.msra.mxu0 %v305
    %307 = vmatprep.subr.mxu0 0.0
    %v308 = vand.u32 %v27, 4294901760
    %309 = vmatpush1.xpose.msra.mxu0 %v308
    %310 = vmatprep.subr.mxu0 0.0
    %311 = vmatpush2.xpose.msra.mxu0 0.0
    %312 = vmatprep.subr.mxu0 0.0
    %313 = vmatpush2.xpose.msra.mxu0 0.0
    %314 = vmatprep.subr.mxu0 0.0
    %315 = vmatpush2.xpose.msra.mxu0 0.0
    %316 = vmatprep.subr.mxu0 0.0
    %317 = vmatpush2.xpose.msra.mxu0 0.0
    %318 = vmatprep.subr.mxu0 0.0
    %319 = vmatpush2.xpose.msra.mxu0 0.0
    %320 = vmatprep.subr.mxu0 0.0
    %321 = vmatpush2.xpose.msra.mxu0 0.0
    %322 = vmatprep.subr.mxu0 0.0
    %323 = vmatpush2.xpose.msra.mxu0 0.0
    %324 = vmatprep.subr.mxu0 0.0
    %325 = vmatpush2.xpose.msra.mxu0 0.0
    %326 = vmatprep.subr.mxu0 0.0
    %327 = vmatpush2.xpose.msra.mxu0 0.0
    %328 = vmatprep.subr.mxu0 0.0
    %329 = vmatpush2.xpose.msra.mxu0 0.0
    %330 = vmatprep.subr.mxu0 0.0
    %331 = vmatpush2.xpose.msra.mxu0 0.0
    %332 = vmatprep.subr.mxu0 0.0
    %333 = vmatpush2.xpose.msra.mxu0 0.0
    %334 = vmatprep.subr.mxu0 0.0
    %335 = vmatpush2.xpose.msra.mxu0 0.0
    %336 = vmatprep.subr.mxu0 0.0
    %337 = vmatpush2.xpose.msra.mxu0 0.0
    %338 = vmatprep.subr.mxu0 0.0
    %339 = vmatpush2.xpose.msra.mxu0 0.0
    %340 = vmatprep.subr.mxu0 0.0
    %341 = vmatpush2.xpose.msra.mxu0 0.0
    %342 = vmatprep.mubr.f32.mxu0 0.0
    %v343 = vand.u32 %v26, 4294901760
    %v344 = vsub.f32 %v26, %v343
    %v345 = vand.u32 %v344, 4294901760
    %346 = vmatmul.mubr.f32.gmra.mxu0 %v345
    %v347 = vpop.f32.mrf.mxu0
    %v348 = vadd.f32 %v272, %v347
    %v349 = vpop.f32.mrf.mxu0
    %350 = vdwg.mxu0
    %351 = vmatprep.subr.mxu0 0.0
    %352 = vmatpush1.xpose.msra.mxu0 0.0
    %353 = vmatprep.subr.mxu0 0.0
    %354 = vmatpush1.xpose.msra.mxu0 0.0
    %355 = vmatprep.subr.mxu0 0.0
    %356 = vmatpush1.xpose.msra.mxu0 0.0
    %357 = vmatprep.subr.mxu0 0.0
    %358 = vmatpush1.xpose.msra.mxu0 0.0
    %359 = vmatprep.subr.mxu0 0.0
    %360 = vmatpush1.xpose.msra.mxu0 0.0
    %361 = vmatprep.subr.mxu0 0.0
    %362 = vmatpush1.xpose.msra.mxu0 0.0
    %363 = vmatprep.subr.mxu0 0.0
    %364 = vmatpush1.xpose.msra.mxu0 0.0
    %365 = vmatprep.subr.mxu0 0.0
    %366 = vmatpush1.xpose.msra.mxu0 0.0
    %367 = vmatprep.subr.mxu0 0.0
    %368 = vmatpush1.xpose.msra.mxu0 0.0
    %369 = vmatprep.subr.mxu0 0.0
    %370 = vmatpush1.xpose.msra.mxu0 0.0
    %371 = vmatprep.subr.mxu0 0.0
    %372 = vmatpush1.xpose.msra.mxu0 0.0
    %373 = vmatprep.subr.mxu0 0.0
    %374 = vmatpush1.xpose.msra.mxu0 0.0
    %375 = vmatprep.subr.mxu0 0.0
    %376 = vmatpush1.xpose.msra.mxu0 0.0
    %377 = vmatprep.subr.mxu0 0.0
    %v378 = vand.u32 %v29, 4294901760
    %v379 = vsub.f32 %v29, %v378
    %v380 = vand.u32 %v379, 4294901760
    %381 = vmatpush1.xpose.msra.mxu0 %v380
    %382 = vmatprep.subr.mxu0 0.0
    %v383 = vand.u32 %v28, 4294901760
    %v384 = vsub.f32 %v28, %v383
    %v385 = vand.u32 %v384, 4294901760
    %386 = vmatpush1.xpose.msra.mxu0 %v385
    %387 = vmatprep.subr.mxu0 0.0
    %v388 = vand.u32 %v27, 4294901760
    %v389 = vsub.f32 %v27, %v388
    %v390 = vand.u32 %v389, 4294901760
    %391 = vmatpush1.xpose.msra.mxu0 %v390
    %392 = vmatprep.subr.mxu0 0.0
    %393 = vmatpush2.xpose.msra.mxu0 0.0
    %394 = vmatprep.subr.mxu0 0.0
    %395 = vmatpush2.xpose.msra.mxu0 0.0
    %396 = vmatprep.subr.mxu0 0.0
    %397 = vmatpush2.xpose.msra.mxu0 0.0
    %398 = vmatprep.subr.mxu0 0.0
    %399 = vmatpush2.xpose.msra.mxu0 0.0
    %400 = vmatprep.subr.mxu0 0.0
    %401 = vmatpush2.xpose.msra.mxu0 0.0
    %402 = vmatprep.subr.mxu0 0.0
    %403 = vmatpush2.xpose.msra.mxu0 0.0
    %404 = vmatprep.subr.mxu0 0.0
    %405 = vmatpush2.xpose.msra.mxu0 0.0
    %406 = vmatprep.subr.mxu0 0.0
    %407 = vmatpush2.xpose.msra.mxu0 0.0
    %408 = vmatprep.subr.mxu0 0.0
    %409 = vmatpush2.xpose.msra.mxu0 0.0
    %410 = vmatprep.subr.mxu0 0.0
    %411 = vmatpush2.xpose.msra.mxu0 0.0
    %412 = vmatprep.subr.mxu0 0.0
    %413 = vmatpush2.xpose.msra.mxu0 0.0
    %414 = vmatprep.subr.mxu0 0.0
    %415 = vmatpush2.xpose.msra.mxu0 0.0
    %416 = vmatprep.subr.mxu0 0.0
    %417 = vmatpush2.xpose.msra.mxu0 0.0
    %418 = vmatprep.subr.mxu0 0.0
    %419 = vmatpush2.xpose.msra.mxu0 0.0
    %420 = vmatprep.subr.mxu0 0.0
    %421 = vmatpush2.xpose.msra.mxu0 0.0
    %422 = vmatprep.subr.mxu0 0.0
    %423 = vmatpush2.xpose.msra.mxu0 0.0
    %424 = vmatprep.mubr.f32.mxu0 0.0
    %v425 = vand.u32 %v26, 4294901760
    %426 = vmatmul.mubr.f32.gmra.mxu0 %v425
    %v427 = vpop.f32.mrf.mxu0
    %v428 = vadd.f32 %v348, %v427
    %v429 = vpop.f32.mrf.mxu0
    %430 = vdwg.mxu0
    %431 = vmatprep.subr.mxu0 0.0
    %432 = vmatpush1.xpose.msra.mxu0 0.0
    %433 = vmatprep.subr.mxu0 0.0
    %434 = vmatpush1.xpose.msra.mxu0 0.0
    %435 = vmatprep.subr.mxu0 0.0
    %436 = vmatpush1.xpose.msra.mxu0 0.0
    %437 = vmatprep.subr.mxu0 0.0
    %438 = vmatpush1.xpose.msra.mxu0 0.0
    %439 = vmatprep.subr.mxu0 0.0
    %440 = vmatpush1.xpose.msra.mxu0 0.0
    %441 = vmatprep.subr.mxu0 0.0
    %442 = vmatpush1.xpose.msra.mxu0 0.0
    %443 = vmatprep.subr.mxu0 0.0
    %444 = vmatpush1.xpose.msra.mxu0 0.0
    %445 = vmatprep.subr.mxu0 0.0
    %446 = vmatpush1.xpose.msra.mxu0 0.0
    %447 = vmatprep.subr.mxu0 0.0
    %448 = vmatpush1.xpose.msra.mxu0 0.0
    %449 = vmatprep.subr.mxu0 0.0
    %450 = vmatpush1.xpose.msra.mxu0 0.0
    %451 = vmatprep.subr.mxu0 0.0
    %452 = vmatpush1.xpose.msra.mxu0 0.0
    %453 = vmatprep.subr.mxu0 0.0
    %454 = vmatpush1.xpose.msra.mxu0 0.0
    %455 = vmatprep.subr.mxu0 0.0
    %456 = vmatpush1.xpose.msra.mxu0 0.0
    %457 = vmatprep.subr.mxu0 0.0
    %v458 = vand.u32 %v29, 4294901760
    %459 = vmatpush1.xpose.msra.mxu0 %v458
    %460 = vmatprep.subr.mxu0 0.0
    %v461 = vand.u32 %v28, 4294901760
    %462 = vmatpush1.xpose.msra.mxu0 %v461
    %463 = vmatprep.subr.mxu0 0.0
    %v464 = vand.u32 %v27, 4294901760
    %465 = vmatpush1.xpose.msra.mxu0 %v464
    %466 = vmatprep.subr.mxu0 0.0
    %467 = vmatpush2.xpose.msra.mxu0 0.0
    %468 = vmatprep.subr.mxu0 0.0
    %469 = vmatpush2.xpose.msra.mxu0 0.0
    %470 = vmatprep.subr.mxu0 0.0
    %471 = vmatpush2.xpose.msra.mxu0 0.0
    %472 = vmatprep.subr.mxu0 0.0
    %473 = vmatpush2.xpose.msra.mxu0 0.0
    %474 = vmatprep.subr.mxu0 0.0
    %475 = vmatpush2.xpose.msra.mxu0 0.0
    %476 = vmatprep.subr.mxu0 0.0
    %477 = vmatpush2.xpose.msra.mxu0 0.0
    %478 = vmatprep.subr.mxu0 0.0
    %479 = vmatpush2.xpose.msra.mxu0 0.0
    %480 = vmatprep.subr.mxu0 0.0
    %481 = vmatpush2.xpose.msra.mxu0 0.0
    %482 = vmatprep.subr.mxu0 0.0
    %483 = vmatpush2.xpose.msra.mxu0 0.0
    %484 = vmatprep.subr.mxu0 0.0
    %485 = vmatpush2.xpose.msra.mxu0 0.0
    %486 = vmatprep.subr.mxu0 0.0
    %487 = vmatpush2.xpose.msra.mxu0 0.0
    %488 = vmatprep.subr.mxu0 0.0
    %489 = vmatpush2.xpose.msra.mxu0 0.0
    %490 = vmatprep.subr.mxu0 0.0
    %491 = vmatpush2.xpose.msra.mxu0 0.0
    %492 = vmatprep.subr.mxu0 0.0
    %493 = vmatpush2.xpose.msra.mxu0 0.0
    %494 = vmatprep.subr.mxu0 0.0
    %495 = vmatpush2.xpose.msra.mxu0 0.0
    %496 = vmatprep.subr.mxu0 0.0
    %497 = vmatpush2.xpose.msra.mxu0 0.0
    %498 = vmatprep.mubr.f32.mxu0 0.0
    %v499 = vand.u32 %v26, 4294901760
    %500 = vmatmul.mubr.f32.gmra.mxu0 %v499
    %v501 = vpop.f32.mrf.mxu0
    %v502 = vadd.f32 %v428, %v501
    %v503 = vpop.f32.mrf.mxu0
    %504 = vdwg.mxu0
    %v505 = vmax.f32 %v502, 0.0
    %vm506 = vcmask 195584
    %v508 = vsel %vm506, %v505, 0
    %510 = vmatprep.subr.mxu0 0.0
    %511 = vmatpush1.msra.mxu0 0.0
    %512 = vmatprep.subr.mxu0 0.0
    %513 = vmatpush1.msra.mxu0 0.0
    %514 = vmatprep.subr.mxu0 0.0
    %515 = vmatpush1.msra.mxu0 0.0
    %516 = vmatprep.subr.mxu0 0.0
    %517 = vmatpush1.msra.mxu0 0.0
    %518 = vmatprep.subr.mxu0 0.0
    %519 = vmatpush1.msra.mxu0 0.0
    %520 = vmatprep.subr.mxu0 0.0
    %521 = vmatpush1.msra.mxu0 0.0
    %522 = vmatprep.subr.mxu0 0.0
    %523 = vmatpush1.msra.mxu0 0.0
    %524 = vmatprep.subr.mxu0 0.0
    %525 = vmatpush1.msra.mxu0 0.0
    %526 = vmatprep.subr.mxu0 0.0
    %527 = vmatpush1.msra.mxu0 0.0
    %528 = vmatprep.subr.mxu0 0.0
    %529 = vmatpush1.msra.mxu0 0.0
    %530 = vmatprep.subr.mxu0 0.0
    %531 = vmatpush1.msra.mxu0 0.0
    %532 = vmatprep.subr.mxu0 0.0
    %533 = vmatpush1.msra.mxu0 0.0
    %534 = vmatprep.subr.mxu0 0.0
    %535 = vmatpush1.msra.mxu0 0.0
    %536 = vmatprep.subr.mxu0 0.0
    %v537 = vand.u32 %v32, 4294901760
    %538 = vmatpush1.msra.mxu0 %v537
    %539 = vmatprep.subr.mxu0 0.0
    %v540 = vand.u32 %v31, 4294901760
    %541 = vmatpush1.msra.mxu0 %v540
    %542 = vmatprep.subr.mxu0 0.0
    %v543 = vand.u32 %v30, 4294901760
    %544 = vmatpush1.msra.mxu0 %v543
    %545 = vmatprep.subr.mxu0 0.0
    %546 = vmatpush2.msra.mxu0 0.0
    %547 = vmatprep.subr.mxu0 0.0
    %548 = vmatpush2.msra.mxu0 0.0
    %549 = vmatprep.subr.mxu0 0.0
    %550 = vmatpush2.msra.mxu0 0.0
    %551 = vmatprep.subr.mxu0 0.0
    %552 = vmatpush2.msra.mxu0 0.0
    %553 = vmatprep.subr.mxu0 0.0
    %554 = vmatpush2.msra.mxu0 0.0
    %555 = vmatprep.subr.mxu0 0.0
    %556 = vmatpush2.msra.mxu0 0.0
    %557 = vmatprep.subr.mxu0 0.0
    %558 = vmatpush2.msra.mxu0 0.0
    %559 = vmatprep.subr.mxu0 0.0
    %560 = vmatpush2.msra.mxu0 0.0
    %561 = vmatprep.subr.mxu0 0.0
    %562 = vmatpush2.msra.mxu0 0.0
    %563 = vmatprep.subr.mxu0 0.0
    %564 = vmatpush2.msra.mxu0 0.0
    %565 = vmatprep.subr.mxu0 0.0
    %566 = vmatpush2.msra.mxu0 0.0
    %567 = vmatprep.subr.mxu0 0.0
    %568 = vmatpush2.msra.mxu0 0.0
    %569 = vmatprep.subr.mxu0 0.0
    %570 = vmatpush2.msra.mxu0 0.0
    %571 = vmatprep.subr.mxu0 0.0
    %572 = vmatpush2.msra.mxu0 0.0
    %573 = vmatprep.subr.mxu0 0.0
    %574 = vmatpush2.msra.mxu0 0.0
    %575 = vmatprep.subr.mxu0 0.0
    %576 = vmatpush2.msra.mxu0 0.0
    %577 = vmatprep.mubr.f32.mxu0 0.0
    %v578 = vand.u32 %v508, 4294901760
    %v579 = vsub.f32 %v508, %v578
    %v580 = vand.u32 %v579, 4294901760
    %v581 = vsub.f32 %v579, %v580
    %v582 = vand.u32 %v581, 4294901760
    %583 = vmatmul.mubr.f32.gmra.mxu0 %v582
    %v584 = vpop.f32.mrf.mxu0
    %v585 = vadd.f32 0.0, %v584
    %v586 = vpop.f32.mrf.mxu0
    %587 = vdwg.mxu0
    %588 = vmatprep.subr.mxu0 0.0
    %589 = vmatpush1.msra.mxu0 0.0
    %590 = vmatprep.subr.mxu0 0.0
    %591 = vmatpush1.msra.mxu0 0.0
    %592 = vmatprep.subr.mxu0 0.0
    %593 = vmatpush1.msra.mxu0 0.0
    %594 = vmatprep.subr.mxu0 0.0
    %595 = vmatpush1.msra.mxu0 0.0
    %596 = vmatprep.subr.mxu0 0.0
    %597 = vmatpush1.msra.mxu0 0.0
    %598 = vmatprep.subr.mxu0 0.0
    %599 = vmatpush1.msra.mxu0 0.0
    %600 = vmatprep.subr.mxu0 0.0
    %601 = vmatpush1.msra.mxu0 0.0
    %602 = vmatprep.subr.mxu0 0.0
    %603 = vmatpush1.msra.mxu0 0.0
    %604 = vmatprep.subr.mxu0 0.0
    %605 = vmatpush1.msra.mxu0 0.0
    %606 = vmatprep.subr.mxu0 0.0
    %607 = vmatpush1.msra.mxu0 0.0
    %608 = vmatprep.subr.mxu0 0.0
    %609 = vmatpush1.msra.mxu0 0.0
    %610 = vmatprep.subr.mxu0 0.0
    %611 = vmatpush1.msra.mxu0 0.0
    %612 = vmatprep.subr.mxu0 0.0
    %613 = vmatpush1.msra.mxu0 0.0
    %614 = vmatprep.subr.mxu0 0.0
    %v615 = vand.u32 %v32, 4294901760
    %v616 = vsub.f32 %v32, %v615
    %v617 = vand.u32 %v616, 4294901760
    %v618 = vsub.f32 %v616, %v617
    %v619 = vand.u32 %v618, 4294901760
    %620 = vmatpush1.msra.mxu0 %v619
    %621 = vmatprep.subr.mxu0 0.0
    %v622 = vand.u32 %v31, 4294901760
    %v623 = vsub.f32 %v31, %v622
    %v624 = vand.u32 %v623, 4294901760
    %v625 = vsub.f32 %v623, %v624
    %v626 = vand.u32 %v625, 4294901760
    %627 = vmatpush1.msra.mxu0 %v626
    %628 = vmatprep.subr.mxu0 0.0
    %v629 = vand.u32 %v30, 4294901760
    %v630 = vsub.f32 %v30, %v629
    %v631 = vand.u32 %v630, 4294901760
    %v632 = vsub.f32 %v630, %v631
    %v633 = vand.u32 %v632, 4294901760
    %634 = vmatpush1.msra.mxu0 %v633
    %635 = vmatprep.subr.mxu0 0.0
    %636 = vmatpush2.msra.mxu0 0.0
    %637 = vmatprep.subr.mxu0 0.0
    %638 = vmatpush2.msra.mxu0 0.0
    %639 = vmatprep.subr.mxu0 0.0
    %640 = vmatpush2.msra.mxu0 0.0
    %641 = vmatprep.subr.mxu0 0.0
    %642 = vmatpush2.msra.mxu0 0.0
    %643 = vmatprep.subr.mxu0 0.0
    %644 = vmatpush2.msra.mxu0 0.0
    %645 = vmatprep.subr.mxu0 0.0
    %646 = vmatpush2.msra.mxu0 0.0
    %647 = vmatprep.subr.mxu0 0.0
    %648 = vmatpush2.msra.mxu0 0.0
    %649 = vmatprep.subr.mxu0 0.0
    %650 = vmatpush2.msra.mxu0 0.0
    %651 = vmatprep.subr.mxu0 0.0
    %652 = vmatpush2.msra.mxu0 0.0
    %653 = vmatprep.subr.mxu0 0.0
    %654 = vmatpush2.msra.mxu0 0.0
    %655 = vmatprep.subr.mxu0 0.0
    %656 = vmatpush2.msra.mxu0 0.0
    %657 = vmatprep.subr.mxu0 0.0
    %658 = vmatpush2.msra.mxu0 0.0
    %659 = vmatprep.subr.mxu0 0.0
    %660 = vmatpush2.msra.mxu0 0.0
    %661 = vmatprep.subr.mxu0 0.0
    %662 = vmatpush2.msra.mxu0 0.0
    %663 = vmatprep.subr.mxu0 0.0
    %664 = vmatpush2.msra.mxu0 0.0
    %665 = vmatprep.subr.mxu0 0.0
    %666 = vmatpush2.msra.mxu0 0.0
    %667 = vmatprep.mubr.f32.mxu0 0.0
    %v668 = vand.u32 %v508, 4294901760
    %669 = vmatmul.mubr.f32.gmra.mxu0 %v668
    %v670 = vpop.f32.mrf.mxu0
    %v671 = vadd.f32 %v585, %v670
    %v672 = vpop.f32.mrf.mxu0
    %673 = vdwg.mxu0
    %674 = vmatprep.subr.mxu0 0.0
    %675 = vmatpush1.msra.mxu0 0.0
    %676 = vmatprep.subr.mxu0 0.0
    %677 = vmatpush1.msra.mxu0 0.0
    %678 = vmatprep.subr.mxu0 0.0
    %679 = vmatpush1.msra.mxu0 0.0
    %680 = vmatprep.subr.mxu0 0.0
    %681 = vmatpush1.msra.mxu0 0.0
    %682 = vmatprep.subr.mxu0 0.0
    %683 = vmatpush1.msra.mxu0 0.0
    %684 = vmatprep.subr.mxu0 0.0
    %685 = vmatpush1.msra.mxu0 0.0
    %686 = vmatprep.subr.mxu0 0.0
    %687 = vmatpush1.msra.mxu0 0.0
    %688 = vmatprep.subr.mxu0 0.0
    %689 = vmatpush1.msra.mxu0 0.0
    %690 = vmatprep.subr.mxu0 0.0
    %691 = vmatpush1.msra.mxu0 0.0
    %692 = vmatprep.subr.mxu0 0.0
    %693 = vmatpush1.msra.mxu0 0.0
    %694 = vmatprep.subr.mxu0 0.0
    %695 = vmatpush1.msra.mxu0 0.0
    %696 = vmatprep.subr.mxu0 0.0
    %697 = vmatpush1.msra.mxu0 0.0
    %698 = vmatprep.subr.mxu0 0.0
    %699 = vmatpush1.msra.mxu0 0.0
    %700 = vmatprep.subr.mxu0 0.0
    %v701 = vand.u32 %v32, 4294901760
    %v702 = vsub.f32 %v32, %v701
    %703 = vmatpush1.msra.mxu0 %v702
    %704 = vmatprep.subr.mxu0 0.0
    %v705 = vand.u32 %v31, 4294901760
    %v706 = vsub.f32 %v31, %v705
    %707 = vmatpush1.msra.mxu0 %v706
    %708 = vmatprep.subr.mxu0 0.0
    %v709 = vand.u32 %v30, 4294901760
    %v710 = vsub.f32 %v30, %v709
    %711 = vmatpush1.msra.mxu0 %v710
    %712 = vmatprep.subr.mxu0 0.0
    %713 = vmatpush2.msra.mxu0 0.0
    %714 = vmatprep.subr.mxu0 0.0
    %715 = vmatpush2.msra.mxu0 0.0
    %716 = vmatprep.subr.mxu0 0.0
    %717 = vmatpush2.msra.mxu0 0.0
    %718 = vmatprep.subr.mxu0 0.0
    %719 = vmatpush2.msra.mxu0 0.0
    %720 = vmatprep.subr.mxu0 0.0
    %721 = vmatpush2.msra.mxu0 0.0
    %722 = vmatprep.subr.mxu0 0.0
    %723 = vmatpush2.msra.mxu0 0.0
    %724 = vmatprep.subr.mxu0 0.0
    %725 = vmatpush2.msra.mxu0 0.0
    %726 = vmatprep.subr.mxu0 0.0
    %727 = vmatpush2.msra.mxu0 0.0
    %728 = vmatprep.subr.mxu0 0.0
    %729 = vmatpush2.msra.mxu0 0.0
    %730 = vmatprep.subr.mxu0 0.0
    %731 = vmatpush2.msra.mxu0 0.0
    %732 = vmatprep.subr.mxu0 0.0
    %733 = vmatpush2.msra.mxu0 0.0
    %734 = vmatprep.subr.mxu0 0.0
    %735 = vmatpush2.msra.mxu0 0.0
    %736 = vmatprep.subr.mxu0 0.0
    %737 = vmatpush2.msra.mxu0 0.0
    %738 = vmatprep.subr.mxu0 0.0
    %739 = vmatpush2.msra.mxu0 0.0
    %740 = vmatprep.subr.mxu0 0.0
    %741 = vmatpush2.msra.mxu0 0.0
    %742 = vmatprep.subr.mxu0 0.0
    %743 = vmatpush2.msra.mxu0 0.0
    %744 = vmatprep.mubr.f32.mxu0 0.0
    %v745 = vand.u32 %v508, 4294901760
    %v746 = vsub.f32 %v508, %v745
    %747 = vmatmul.mubr.f32.gmra.mxu0 %v746
    %v748 = vpop.f32.mrf.mxu0
    %v749 = vadd.f32 %v671, %v748
    %v750 = vpop.f32.mrf.mxu0
    %751 = vdwg.mxu0
    %752 = vmatprep.subr.mxu0 0.0
    %753 = vmatpush1.msra.mxu0 0.0
    %754 = vmatprep.subr.mxu0 0.0
    %755 = vmatpush1.msra.mxu0 0.0
    %756 = vmatprep.subr.mxu0 0.0
    %757 = vmatpush1.msra.mxu0 0.0
    %758 = vmatprep.subr.mxu0 0.0
    %759 = vmatpush1.msra.mxu0 0.0
    %760 = vmatprep.subr.mxu0 0.0
    %761 = vmatpush1.msra.mxu0 0.0
    %762 = vmatprep.subr.mxu0 0.0
    %763 = vmatpush1.msra.mxu0 0.0
    %764 = vmatprep.subr.mxu0 0.0
    %765 = vmatpush1.msra.mxu0 0.0
    %766 = vmatprep.subr.mxu0 0.0
    %767 = vmatpush1.msra.mxu0 0.0
    %768 = vmatprep.subr.mxu0 0.0
    %769 = vmatpush1.msra.mxu0 0.0
    %770 = vmatprep.subr.mxu0 0.0
    %771 = vmatpush1.msra.mxu0 0.0
    %772 = vmatprep.subr.mxu0 0.0
    %773 = vmatpush1.msra.mxu0 0.0
    %774 = vmatprep.subr.mxu0 0.0
    %775 = vmatpush1.msra.mxu0 0.0
    %776 = vmatprep.subr.mxu0 0.0
    %777 = vmatpush1.msra.mxu0 0.0
    %778 = vmatprep.subr.mxu0 0.0
    %v779 = vand.u32 %v32, 4294901760
    %780 = vmatpush1.msra.mxu0 %v779
    %781 = vmatprep.subr.mxu0 0.0
    %v782 = vand.u32 %v31, 4294901760
    %783 = vmatpush1.msra.mxu0 %v782
    %784 = vmatprep.subr.mxu0 0.0
    %v785 = vand.u32 %v30, 4294901760
    %786 = vmatpush1.msra.mxu0 %v785
    %787 = vmatprep.subr.mxu0 0.0
    %788 = vmatpush2.msra.mxu0 0.0
    %789 = vmatprep.subr.mxu0 0.0
    %790 = vmatpush2.msra.mxu0 0.0
    %791 = vmatprep.subr.mxu0 0.0
    %792 = vmatpush2.msra.mxu0 0.0
    %793 = vmatprep.subr.mxu0 0.0
    %794 = vmatpush2.msra.mxu0 0.0
    %795 = vmatprep.subr.mxu0 0.0
    %796 = vmatpush2.msra.mxu0 0.0
    %797 = vmatprep.subr.mxu0 0.0
    %798 = vmatpush2.msra.mxu0 0.0
    %799 = vmatprep.subr.mxu0 0.0
    %800 = vmatpush2.msra.mxu0 0.0
    %801 = vmatprep.subr.mxu0 0.0
    %802 = vmatpush2.msra.mxu0 0.0
    %803 = vmatprep.subr.mxu0 0.0
    %804 = vmatpush2.msra.mxu0 0.0
    %805 = vmatprep.subr.mxu0 0.0
    %806 = vmatpush2.msra.mxu0 0.0
    %807 = vmatprep.subr.mxu0 0.0
    %808 = vmatpush2.msra.mxu0 0.0
    %809 = vmatprep.subr.mxu0 0.0
    %810 = vmatpush2.msra.mxu0 0.0
    %811 = vmatprep.subr.mxu0 0.0
    %812 = vmatpush2.msra.mxu0 0.0
    %813 = vmatprep.subr.mxu0 0.0
    %814 = vmatpush2.msra.mxu0 0.0
    %815 = vmatprep.subr.mxu0 0.0
    %816 = vmatpush2.msra.mxu0 0.0
    %817 = vmatprep.subr.mxu0 0.0
    %818 = vmatpush2.msra.mxu0 0.0
    %819 = vmatprep.mubr.f32.mxu0 0.0
    %v820 = vand.u32 %v508, 4294901760
    %v821 = vsub.f32 %v508, %v820
    %v822 = vand.u32 %v821, 4294901760
    %823 = vmatmul.mubr.f32.gmra.mxu0 %v822
    %v824 = vpop.f32.mrf.mxu0
    %v825 = vadd.f32 %v749, %v824
    %v826 = vpop.f32.mrf.mxu0
    %827 = vdwg.mxu0
    %828 = vmatprep.subr.mxu0 0.0
    %829 = vmatpush1.msra.mxu0 0.0
    %830 = vmatprep.subr.mxu0 0.0
    %831 = vmatpush1.msra.mxu0 0.0
    %832 = vmatprep.subr.mxu0 0.0
    %833 = vmatpush1.msra.mxu0 0.0
    %834 = vmatprep.subr.mxu0 0.0
    %835 = vmatpush1.msra.mxu0 0.0
    %836 = vmatprep.subr.mxu0 0.0
    %837 = vmatpush1.msra.mxu0 0.0
    %838 = vmatprep.subr.mxu0 0.0
    %839 = vmatpush1.msra.mxu0 0.0
    %840 = vmatprep.subr.mxu0 0.0
    %841 = vmatpush1.msra.mxu0 0.0
    %842 = vmatprep.subr.mxu0 0.0
    %843 = vmatpush1.msra.mxu0 0.0
    %844 = vmatprep.subr.mxu0 0.0
    %845 = vmatpush1.msra.mxu0 0.0
    %846 = vmatprep.subr.mxu0 0.0
    %847 = vmatpush1.msra.mxu0 0.0
    %848 = vmatprep.subr.mxu0 0.0
    %849 = vmatpush1.msra.mxu0 0.0
    %850 = vmatprep.subr.mxu0 0.0
    %851 = vmatpush1.msra.mxu0 0.0
    %852 = vmatprep.subr.mxu0 0.0
    %853 = vmatpush1.msra.mxu0 0.0
    %854 = vmatprep.subr.mxu0 0.0
    %v855 = vand.u32 %v32, 4294901760
    %v856 = vsub.f32 %v32, %v855
    %v857 = vand.u32 %v856, 4294901760
    %858 = vmatpush1.msra.mxu0 %v857
    %859 = vmatprep.subr.mxu0 0.0
    %v860 = vand.u32 %v31, 4294901760
    %v861 = vsub.f32 %v31, %v860
    %v862 = vand.u32 %v861, 4294901760
    %863 = vmatpush1.msra.mxu0 %v862
    %864 = vmatprep.subr.mxu0 0.0
    %v865 = vand.u32 %v30, 4294901760
    %v866 = vsub.f32 %v30, %v865
    %v867 = vand.u32 %v866, 4294901760
    %868 = vmatpush1.msra.mxu0 %v867
    %869 = vmatprep.subr.mxu0 0.0
    %870 = vmatpush2.msra.mxu0 0.0
    %871 = vmatprep.subr.mxu0 0.0
    %872 = vmatpush2.msra.mxu0 0.0
    %873 = vmatprep.subr.mxu0 0.0
    %874 = vmatpush2.msra.mxu0 0.0
    %875 = vmatprep.subr.mxu0 0.0
    %876 = vmatpush2.msra.mxu0 0.0
    %877 = vmatprep.subr.mxu0 0.0
    %878 = vmatpush2.msra.mxu0 0.0
    %879 = vmatprep.subr.mxu0 0.0
    %880 = vmatpush2.msra.mxu0 0.0
    %881 = vmatprep.subr.mxu0 0.0
    %882 = vmatpush2.msra.mxu0 0.0
    %883 = vmatprep.subr.mxu0 0.0
    %884 = vmatpush2.msra.mxu0 0.0
    %885 = vmatprep.subr.mxu0 0.0
    %886 = vmatpush2.msra.mxu0 0.0
    %887 = vmatprep.subr.mxu0 0.0
    %888 = vmatpush2.msra.mxu0 0.0
    %889 = vmatprep.subr.mxu0 0.0
    %890 = vmatpush2.msra.mxu0 0.0
    %891 = vmatprep.subr.mxu0 0.0
    %892 = vmatpush2.msra.mxu0 0.0
    %893 = vmatprep.subr.mxu0 0.0
    %894 = vmatpush2.msra.mxu0 0.0
    %895 = vmatprep.subr.mxu0 0.0
    %896 = vmatpush2.msra.mxu0 0.0
    %897 = vmatprep.subr.mxu0 0.0
    %898 = vmatpush2.msra.mxu0 0.0
    %899 = vmatprep.subr.mxu0 0.0
    %900 = vmatpush2.msra.mxu0 0.0
    %901 = vmatprep.mubr.f32.mxu0 0.0
    %v902 = vand.u32 %v508, 4294901760
    %903 = vmatmul.mubr.f32.gmra.mxu0 %v902
    %v904 = vpop.f32.mrf.mxu0
    %v905 = vadd.f32 %v825, %v904
    %v906 = vpop.f32.mrf.mxu0
    %907 = vdwg.mxu0
    %908 = vmatprep.subr.mxu0 0.0
    %909 = vmatpush1.msra.mxu0 0.0
    %910 = vmatprep.subr.mxu0 0.0
    %911 = vmatpush1.msra.mxu0 0.0
    %912 = vmatprep.subr.mxu0 0.0
    %913 = vmatpush1.msra.mxu0 0.0
    %914 = vmatprep.subr.mxu0 0.0
    %915 = vmatpush1.msra.mxu0 0.0
    %916 = vmatprep.subr.mxu0 0.0
    %917 = vmatpush1.msra.mxu0 0.0
    %918 = vmatprep.subr.mxu0 0.0
    %919 = vmatpush1.msra.mxu0 0.0
    %920 = vmatprep.subr.mxu0 0.0
    %921 = vmatpush1.msra.mxu0 0.0
    %922 = vmatprep.subr.mxu0 0.0
    %923 = vmatpush1.msra.mxu0 0.0
    %924 = vmatprep.subr.mxu0 0.0
    %925 = vmatpush1.msra.mxu0 0.0
    %926 = vmatprep.subr.mxu0 0.0
    %927 = vmatpush1.msra.mxu0 0.0
    %928 = vmatprep.subr.mxu0 0.0
    %929 = vmatpush1.msra.mxu0 0.0
    %930 = vmatprep.subr.mxu0 0.0
    %931 = vmatpush1.msra.mxu0 0.0
    %932 = vmatprep.subr.mxu0 0.0
    %933 = vmatpush1.msra.mxu0 0.0
    %934 = vmatprep.subr.mxu0 0.0
    %v935 = vand.u32 %v32, 4294901760
    %936 = vmatpush1.msra.mxu0 %v935
    %937 = vmatprep.subr.mxu0 0.0
    %v938 = vand.u32 %v31, 4294901760
    %939 = vmatpush1.msra.mxu0 %v938
    %940 = vmatprep.subr.mxu0 0.0
    %v941 = vand.u32 %v30, 4294901760
    %942 = vmatpush1.msra.mxu0 %v941
    %943 = vmatprep.subr.mxu0 0.0
    %944 = vmatpush2.msra.mxu0 0.0
    %945 = vmatprep.subr.mxu0 0.0
    %946 = vmatpush2.msra.mxu0 0.0
    %947 = vmatprep.subr.mxu0 0.0
    %948 = vmatpush2.msra.mxu0 0.0
    %949 = vmatprep.subr.mxu0 0.0
    %950 = vmatpush2.msra.mxu0 0.0
    %951 = vmatprep.subr.mxu0 0.0
    %952 = vmatpush2.msra.mxu0 0.0
    %953 = vmatprep.subr.mxu0 0.0
    %954 = vmatpush2.msra.mxu0 0.0
    %955 = vmatprep.subr.mxu0 0.0
    %956 = vmatpush2.msra.mxu0 0.0
    %957 = vmatprep.subr.mxu0 0.0
    %958 = vmatpush2.msra.mxu0 0.0
    %959 = vmatprep.subr.mxu0 0.0
    %960 = vmatpush2.msra.mxu0 0.0
    %961 = vmatprep.subr.mxu0 0.0
    %962 = vmatpush2.msra.mxu0 0.0
    %963 = vmatprep.subr.mxu0 0.0
    %964 = vmatpush2.msra.mxu0 0.0
    %965 = vmatprep.subr.mxu0 0.0
    %966 = vmatpush2.msra.mxu0 0.0
    %967 = vmatprep.subr.mxu0 0.0
    %968 = vmatpush2.msra.mxu0 0.0
    %969 = vmatprep.subr.mxu0 0.0
    %970 = vmatpush2.msra.mxu0 0.0
    %971 = vmatprep.subr.mxu0 0.0
    %972 = vmatpush2.msra.mxu0 0.0
    %973 = vmatprep.subr.mxu0 0.0
    %974 = vmatpush2.msra.mxu0 0.0
    %975 = vmatprep.mubr.f32.mxu0 0.0
    %v976 = vand.u32 %v508, 4294901760
    %977 = vmatmul.mubr.f32.gmra.mxu0 %v976
    %v978 = vpop.f32.mrf.mxu0
    %v979 = vadd.f32 %v905, %v978
    %v980 = vpop.f32.mrf.mxu0
    %981 = vdwg.mxu0
    %v982 = vand.u32 2147483647, %v979
    %983 = vadd.xlane.f32.xlu0 %v982
    %v984 = vpop.xlane.xlu0 %983
    %vm985 = vcmask 7168
    %v986 = vsel %vm985, %v984, 0.0
    %987 = vadd.xlane.f32.xlu0 %v986
    %v988 = vpop.xlane.xlu0 %987
    %v989 = vrot.slane %v988, 4
    %v990 = vadd.f32 %v988, %v989
    %v991 = vrot.slane %v990, 2
    %v992 = vadd.f32 %v990, %v991
    %v993 = vrot.slane %v992, 1
    %v994 = vadd.f32 %v992, %v993
    %s995 = vtos %v994
    %996 = vadd.xlane.f32.xlu0 %v979
    %v997 = vpop.xlane.xlu0 %996
    %v998 = vsel %vm985, %v997, 0.0
    %999 = vadd.xlane.f32.xlu0 %v998
    %v1000 = vpop.xlane.xlu0 %999
    %v1001 = vrot.slane %v1000, 4
    %v1002 = vadd.f32 %v1000, %v1001
    %v1003 = vrot.slane %v1002, 2
    %v1004 = vadd.f32 %v1002, %v1003
    %v1005 = vrot.slane %v1004, 1
    %v1006 = vadd.f32 %v1004, %v1005
    %s1007 = vtos %v1006
    %s1009 = sshrl.u32 %s995, 23
    %s1010 = ssub.s32 %s1009, 127
    %s1011 = sand.u32 %s995, 8388607
    %p1012 = scmp.ne.s32.totalorder %s1011, 0
    %p1013 = scmp.gt.f32.partialorder %s995, 1.0
    %s1014 = scalar_select %p1012, 1, 0
    %s1015 = sadd.s32 %s1010, %s1014
    %s1016 = scalar_select %p1013, %s1015, 0
    %p1017 = scmp.lt.s32.totalorder %s1016, 126
    %s1018 = scalar_select %p1017, %s1016, 126
    %s1019 = ssub.s32 127, %s1018
    %s1020 = smul.u32 %s1019, 8388608
    %s1022 = smul.f32 %s1007, %s1020
    %s1023 = scalar_lea.smem [#allocation5], 0
    %1024 = sst [smem:[%s1023]] %s1022
    // Predicated region
    $region14: #{fixed_hidden_mlp.1} parent=1 // pred_check
      _
    $region15: #{fixed_hidden_mlp.1} parent=1 // pred_check_branch
      %1026 = sbr.rel (0) target = $region17
    $region16: #{fixed_hidden_mlp.1} parent=1 // pred_region
      %s1028 = ssub.s32 16, 16
      %1029 = vsyncadd [#allocation4], %s1028
      %1032 = dma.smem_to_hbm [#allocation5], 16, %s2, [#allocation4]
    $region17: #{fixed_hidden_mlp.1} parent=1 // pred_fallthru
      _
    // Predicated region
    $region18: #{fixed_hidden_mlp.1} parent=1 // pred_check
      _
    $region19: #{fixed_hidden_mlp.1} parent=1 // pred_check_branch
      %1034 = sbr.rel (0) target = $region21
    $region20: #{fixed_hidden_mlp.1} parent=1 // pred_region
      %1035 = dma.done [#allocation4], 16
    $region21: #{fixed_hidden_mlp.1} parent=1 // pred_fallthru
      _
    %1036 = sfence
    %1037 = vsyncpa [#allocation3], 1
    %1038 = vsyncpa [#allocation4], 1

</llo_original>
